<compile_context>
chip_gen: v6e
topology: v6e:2x2x1
jax: 0.10.0
libtpu: 0.0.40
codegen_flags: <defaults>
</compile_context>

<pallas_src>
import functools
import re

import jax
import jax.numpy as jnp
from jax.experimental import pallas as pl
from jax.experimental.pallas import tpu as pltpu

LANE = 128
_SMALL_BYPASS_BYTES = 256 * 1024          # below this, skip pallas_call


def _tpu_generation():
    try:
        kind = jax.devices()[0].device_kind.lower()
        m = re.search(r"(\d+)", kind)
        if m:
            return int(m.group(1))
    except Exception:
        pass
    return 0


_GEN = _tpu_generation()
# Per-buffer tile size.  in+out, double-buffered => ~4x this must stay under
# the scoped-VMEM default (v5e: 16 MiB, v6e/v7x: 32 MiB).
_TILE_BYTES = (6 * 1024 * 1024) if _GEN >= 6 else (3 * 1024 * 1024)
# bf16 VALUs exist on v6e/v7x; keep f32 compute on v5e and older / unknown.
_BF16_COMPUTE = _GEN >= 6
# Only v7x (2 TensorCores/chip) benefits from forcing >=2 grid steps on
# shapes that would otherwise be a single tile.
_SPLIT_FOR_MEGACORE = _GEN >= 7


def _repact_kernel(coef_ref, x_ref, o_ref):
    # coef_ref (VMEM, compute dtype), rows broadcast along lanes:
    #   row 0: pos  = w0 + w1 + w2      (linear slope for x >= 0, excl. hsw)
    #   row 1: neg  = w0 + alpha * w2   (linear slope for x <  0, excl. hsw)
    #   row 2: w3 / 6                   (hardswish coefficient)
    pos = coef_ref[0:1, :]
    neg = coef_ref[1:2, :]
    w3_over_6 = coef_ref[2:3, :]

    x = x_ref[...]
    if x.dtype != coef_ref.dtype:          # trace-time branch
        x = x.astype(coef_ref.dtype)       # e.g. bf16 -> f32 on v5e

    lin = jnp.where(x >= 0, pos, neg)
    # Factored form: x*lin + x*clip(x+3,0,6)*w3/6  ->  one fewer multiply.
    out = x * (lin + jnp.clip(x + 3.0, 0.0, 6.0) * w3_over_6)
    o_ref[...] = out.astype(o_ref.dtype)   # store in native dtype


def _pick_layout(n, itemsize):
    """Choose (lane_w, rows, tile_rows, pad) for a flat array of n elements."""
    sub = max(8, 32 // itemsize)            # sublane packing: f32 8, bf16 16, i8 32
    pad = 0
    lane_w = None
    for cand in (4096, 2048, 1024, 512, 256, 128):
        if n % cand == 0:
            lane_w = cand
            break
    if lane_w is None:                      # rare fallback: pad up to 128 lanes
        # NOTE: pad/slice costs extra HBM passes; only hit when n % 128 != 0.
        lane_w = LANE
        pad = (-n) % LANE
    rows = (n + pad) // lane_w

    tile_rows = max(sub, (_TILE_BYTES // (lane_w * itemsize)) // sub * sub)
    tile_rows = min(rows, tile_rows)        # == rows -> full-dim block (legal)

    if _SPLIT_FOR_MEGACORE and tile_rows == rows and rows >= 2 * sub:
        # Force >=2 grid steps so the single "parallel" axis shards across
        # both TensorCores on v7x.
        tile_rows = ((rows + 1) // 2 + sub - 1) // sub * sub

    if tile_rows < rows and rows % tile_rows:
        # Prefer a tile_rows that divides rows evenly (no masked partial
        # last block), without shrinking the tile below ~half the target.
        for cand in range(tile_rows, max(sub, tile_rows // 2) - 1, -sub):
            if rows % cand == 0:
                tile_rows = cand
                break

    return lane_w, rows, tile_rows, pad


@functools.partial(jax.jit, static_argnames=("force_pallas",))
def repact_softmax_reconstruct(x, actor_atn, prelu_weight, force_pallas=False):
    """Training-path forward of RepAct_Softmax_Reconstruct (elementwise)."""
    orig_shape = x.shape
    dtype = x.dtype
    itemsize = jnp.dtype(dtype).itemsize

    # Fold softmax(ActorAtn) + PReLU slope into 3 coefficients.
    # TODO(synk): assumes nn.PReLU() with a single shared slope (module
    # default); per-channel PReLU would need a per-channel `neg` coefficient.
    w = jax.nn.softmax(actor_atn.astype(jnp.float32))
    alpha = prelu_weight.astype(jnp.float32).reshape(-1)[0]
    pos = w[0] + w[1] + w[2]
    neg = w[0] + alpha * w[2]
    w3_over_6 = w[3] * (1.0 / 6.0)

    n = x.size
    if (not force_pallas) and n * itemsize < _SMALL_BYPASS_BYTES:
        # Tiny activations: pallas_call launch/pipeline cost dwarfs the work;
        # let XLA fuse the elementwise chain instead.
        xf = x.astype(jnp.float32)
        lin = jnp.where(xf >= 0.0, pos, neg)
        out = xf * (lin + jnp.clip(xf + 3.0, 0.0, 6.0) * w3_over_6)
        return out.astype(dtype).reshape(orig_shape)

    compute_dtype = (jnp.bfloat16
                     if (_BF16_COMPUTE and dtype == jnp.bfloat16)
                     else jnp.float32)

    lane_w, rows, tile_rows, pad_amt = _pick_layout(n, itemsize)

    # Lane-broadcast coefficient slab (keeps everything in the vector domain;
    # no scalar-dtype casts inside the kernel).
    coef = jnp.broadcast_to(
        jnp.stack([pos, neg, w3_over_6]).astype(compute_dtype)[:, None],
        (3, lane_w))

    if pad_amt:
        # Rare fallback (n % 128 != 0): pad once, slice once after the kernel.
        x2d = jnp.pad(x.reshape(-1), (0, pad_amt)).reshape(rows, lane_w)
    else:
        x2d = x.reshape(rows, lane_w)          # free (contiguous) reshape

    out2d = pl.pallas_call(
        _repact_kernel,
        out_shape=jax.ShapeDtypeStruct((rows, lane_w), dtype),
        grid_spec=pltpu.PrefetchScalarGridSpec(
            num_scalar_prefetch=0,
            grid=(pl.cdiv(rows, tile_rows),),
            in_specs=[
                pl.BlockSpec((3, lane_w), lambda i: (0, 0)),          # coefs
                pl.BlockSpec((tile_rows, lane_w), lambda i: (i, 0)),  # x tile
            ],
            out_specs=pl.BlockSpec((tile_rows, lane_w), lambda i: (i, 0)),
        ),
        compiler_params=pltpu.CompilerParams(
            dimension_semantics=("parallel",),   # shards across TCs on v7x
        ),
    )(coef, x2d)

    if pad_amt:
        return out2d.reshape(-1)[:n].reshape(orig_shape)
    return out2d.reshape(orig_shape)


def _reference(x, actor_atn, prelu_weight):
    w = jax.nn.softmax(actor_atn.astype(jnp.float32))
    a = prelu_weight.astype(jnp.float32).reshape(-1)[0]
    xf = x.astype(jnp.float32)
    ident = xf * w[0]
    relu = jnp.maximum(xf, 0.0) * w[1]
    prelu = jnp.where(xf >= 0.0, xf, a * xf) * w[2]
    hsw = xf * jnp.clip(xf + 3.0, 0.0, 6.0) / 6.0 * w[3]
    return (relu + ident + hsw + prelu).astype(x.dtype)


if __name__ == "__main__":
    key = jax.random.PRNGKey(0)
    k_x, k_atn, k_big = jax.random.split(key, 3)

    # Parameter shapes per module __init__:
    #   ActorAtn: (4,) ~ U[0,1)   |   PReLU weight: (1,) init 0.25
    actor_atn = jax.random.uniform(k_atn, (4,), dtype=jnp.float32)
    prelu_weight = jnp.full((1,), 0.25, dtype=jnp.float32)

    # 1) Small NCHW activation (module-scale shape): exercise the Pallas
    #    kernel (forced) and the small-size jnp bypass.
    x = jax.random.normal(k_x, (2, 4, 16, 16), dtype=jnp.float32) * 4.0
    ref = _reference(x, actor_atn, prelu_weight)

    out = jax.block_until_ready(
        repact_softmax_reconstruct(x, actor_atn, prelu_weight,
                                   force_pallas=True))
    assert out.shape == x.shape and out.dtype == x.dtype
    assert jnp.allclose(out, ref, atol=1e-5, rtol=1e-5), "f32 small mismatch"

    out_bypass = jax.block_until_ready(
        repact_softmax_reconstruct(x, actor_atn, prelu_weight))
    assert jnp.allclose(out_bypass, ref, atol=1e-5, rtol=1e-5), "bypass mismatch"

    # 2) Larger activation: multi-step grid (>=2 steps -> megacore on v7x).
    x_big = jax.random.normal(k_big, (4, 32, 56, 56), dtype=jnp.float32) * 4.0
    out_big = jax.block_until_ready(
        repact_softmax_reconstruct(x_big, actor_atn, prelu_weight))
    ref_big = _reference(x_big, actor_atn, prelu_weight)
    assert out_big.shape == x_big.shape and out_big.dtype == x_big.dtype
    assert jnp.allclose(out_big, ref_big, atol=1e-5, rtol=1e-5), "f32 big mismatch"

    # 3) bf16 in / bf16 out (bf16 compute on v6e/v7x, f32 compute elsewhere).
    x_bf16 = x_big.astype(jnp.bfloat16)
    out_bf16 = jax.block_until_ready(
        repact_softmax_reconstruct(x_bf16, actor_atn, prelu_weight))
    ref_bf16 = _reference(x_bf16, actor_atn, prelu_weight)
    assert out_bf16.shape == x_big.shape and out_bf16.dtype == jnp.bfloat16
    assert jnp.allclose(out_bf16.astype(jnp.float32),
                        ref_bf16.astype(jnp.float32),
                        atol=5e-2, rtol=5e-2), "bf16 mismatch"

    # TODO(synk): inference=True re-parameterized piecewise branch (RepActFuse)
    # and plotRepAct are not implemented; this covers the training forward.

    print("KERNEL_OK")
</pallas_src>

<mosaic_0001>
module attributes {stable_mosaic.version = 11 : i64} {
  func.func @_repact_kernel(%arg0: i32, %arg1: memref<3x2048xf32, #tpu.memory_space<vmem>>, %arg2: memref<1x2048xf32, #tpu.memory_space<vmem>>, %arg3: memref<1x2048xf32, #tpu.memory_space<vmem>>) attributes {dimension_semantics = [#tpu.dimension_semantics<parallel>], iteration_bounds = array<i64: 1>, scalar_prefetch = 0 : i64, scratch_operands = 0 : i64, tpu.core_type = #tpu.core_type<tc>, window_params = [{pipeline_mode = #tpu.pipeline_mode<synchronous>, transform_indices = @transform_0, window_bounds = array<i64: 3, 2048>}, {transform_indices = @transform_1, window_bounds = array<i64: 1, 2048>}, {transform_indices = @transform_2, window_bounds = array<i64: 1, 2048>}]} {
    %c0 = arith.constant 0 : index
    %c0_0 = arith.constant 0 : index
    %0 = vector.load %arg1[%c0, %c0_0] : memref<3x2048xf32, #tpu.memory_space<vmem>>, vector<1x2048xf32>
    %c1 = arith.constant 1 : index
    %c0_1 = arith.constant 0 : index
    %1 = vector.load %arg1[%c1, %c0_1] : memref<3x2048xf32, #tpu.memory_space<vmem>>, vector<1x2048xf32>
    %c2 = arith.constant 2 : index
    %c0_2 = arith.constant 0 : index
    %2 = vector.load %arg1[%c2, %c0_2] : memref<3x2048xf32, #tpu.memory_space<vmem>>, vector<1x2048xf32>
    %c0_3 = arith.constant 0 : index
    %c0_4 = arith.constant 0 : index
    %3 = vector.load %arg2[%c0_3, %c0_4] : memref<1x2048xf32, #tpu.memory_space<vmem>>, vector<1x2048xf32>
    %cst = arith.constant 0.000000e+00 : f32
    %4 = vector.broadcast %cst : f32 to vector<1x2048xf32>
    %5 = arith.cmpf oge, %3, %4 : vector<1x2048xf32>
    %6 = arith.select %5, %0, %1 : vector<1x2048xi1>, vector<1x2048xf32>
    %cst_5 = arith.constant 3.000000e+00 : f32
    %7 = vector.broadcast %cst_5 : f32 to vector<1x2048xf32>
    %8 = arith.addf %3, %7 : vector<1x2048xf32>
    %cst_6 = arith.constant 0.000000e+00 : f32
    %cst_7 = arith.constant 6.000000e+00 : f32
    %9 = vector.broadcast %cst_6 : f32 to vector<1x2048xf32>
    %10 = arith.maximumf %9, %8 : vector<1x2048xf32>
    %11 = vector.broadcast %cst_7 : f32 to vector<1x2048xf32>
    %12 = arith.minimumf %11, %10 : vector<1x2048xf32>
    %13 = arith.mulf %12, %2 : vector<1x2048xf32>
    %14 = arith.addf %6, %13 : vector<1x2048xf32>
    %15 = arith.mulf %3, %14 : vector<1x2048xf32>
    %c0_8 = arith.constant 0 : index
    %c0_9 = arith.constant 0 : index
    %16 = vector.load %arg3[%c0_8, %c0_9] : memref<1x2048xf32, #tpu.memory_space<vmem>>, vector<1x2048xf32>
    tpu.vector_store %arg3[%c0_8, %c0_9], %15 {strides = array<i32>} : memref<1x2048xf32, #tpu.memory_space<vmem>>, vector<1x2048xf32>,
    return
  }
  func.func @transform_0(%arg0: i32) -> (i32, i32) {
    %c0_i32 = arith.constant 0 : i32
    %c0_i32_0 = arith.constant 0 : i32
    %c0_i32_1 = arith.constant 0 : i32
    return %c0_i32, %c0_i32_0 : i32, i32
  }
  func.func @transform_1(%arg0: i32) -> (i32, i32) {
    %c0_i32 = arith.constant 0 : i32
    %c0_i32_0 = arith.constant 0 : i32
    return %arg0, %c0_i32 : i32, i32
  }
  func.func @transform_2(%arg0: i32) -> (i32, i32) {
    %c0_i32 = arith.constant 0 : i32
    %c0_i32_0 = arith.constant 0 : i32
    return %arg0, %c0_i32 : i32, i32
  }
}

</mosaic_0001>

<llo_original>
// kernel: repact_softmax_reconstruct.1
$region0: #{repact_softmax_reconstruct.1}
  #allocation0 [shape = 'u32[]', space=smem, size = 0x4, offset = 0x4, fixed_abs, tag = 'smem constant byte address 0x4 - core index']
  #allocation1 [shape = 'u32[144,128]{1,0:T(1,128)}', space=vmem, size = 0x12000, scoped, tag = 'internal scratch']
  %s0 = inlined_call_operand.vmem [shape: f32[3,2048], index: 0, kind: input, shape index: {}]
  %s1 = inlined_call_operand.vmem [shape: f32[1,2048], index: 1, kind: input, shape index: {}]
  %s2 = inlined_call_operand.vmem [shape: f32[1,2048], index: 2, kind: output, shape index: {}]
  %s3 = sld [smem:[#allocation0]]
  $region18: #{repact_softmax_reconstruct.1} parent=0
    _
  %s5 = ssub.s32 1, %s3
  %s6 = scalar_select 0, %s5, %s3
  // Predicated region
  $region2: #{repact_softmax_reconstruct.1} parent=0 // pred_check
    _
  $region3: #{repact_softmax_reconstruct.1} parent=0 // pred_check_branch
    %8 = sbr.rel (0) target = $region5
  $region4: #{repact_softmax_reconstruct.1} parent=0 // pred_region
    _
  $region5: #{repact_softmax_reconstruct.1} parent=0 // pred_fallthru
    _
  // Predicated region
  $region6: #{repact_softmax_reconstruct.1} parent=0 // pred_check
    _
  $region7: #{repact_softmax_reconstruct.1} parent=0 // pred_check_branch
    %10 = sbr.rel (0) target = $region9
  $region8: #{repact_softmax_reconstruct.1} parent=0 // pred_region
    _
  $region9: #{repact_softmax_reconstruct.1} parent=0 // pred_fallthru
    _
  %v11 = vld [vmem:[%s0] ss:$4 sm:$0xff]
  %s12 = scalar_lea.vmem %s0, 32
  %v13 = vld [vmem:[%s12] ss:$4 sm:$0xff]
  %s14 = scalar_lea.vmem %s0, 1
  %v15 = vld [vmem:[%s14] ss:$4 sm:$0xff]
  %s16 = scalar_lea.vmem %s0, 33
  %v17 = vld [vmem:[%s16] ss:$4 sm:$0xff]
  %s18 = scalar_lea.vmem %s0, 2
  %v19 = vld [vmem:[%s18] ss:$4 sm:$0xff]
  %s20 = scalar_lea.vmem %s0, 34
  %v21 = vld [vmem:[%s20] ss:$4 sm:$0xff]
  %v22 = vld [vmem:[%s1] sm:$0xff]
  %v23 = vld [vmem:[%s1 + $0x8] sm:$0xff]
  %vm24 = vcmp.ge.f32.partialorder %v22, 0.0
  %vm25 = vcmp.ge.f32.partialorder %v23, 0.0
  %v26 = vsel %vm24, %v11, %v15
  %v27 = vsel %vm25, %v13, %v17
  %v28 = vadd.f32 %v22, 3.0
  %v29 = vadd.f32 %v23, 3.0
  %v30 = vmax.f32 %v28, 0.0
  %v31 = vmax.f32 %v29, 0.0
  %v32 = vmin.f32 %v30, 6.0
  %v33 = vmin.f32 %v31, 6.0
  %v34 = vmul.f32 %v32, %v19
  %v35 = vmul.f32 %v33, %v21
  %v36 = vadd.f32 %v26, %v34
  %v37 = vadd.f32 %v27, %v35
  %v38 = vmul.f32 %v22, %v36
  %v39 = vmul.f32 %v23, %v37
  %40 = vst [vmem:[%s2] sm:$0xff] %v38
  %41 = vst [vmem:[%s2 + $0x8] sm:$0xff] %v39
  // Predicated region
  $region10: #{repact_softmax_reconstruct.1} parent=0 // pred_check
    _
  $region11: #{repact_softmax_reconstruct.1} parent=0 // pred_check_branch
    %43 = sbr.rel (0) target = $region13
  $region12: #{repact_softmax_reconstruct.1} parent=0 // pred_region
    _
  $region13: #{repact_softmax_reconstruct.1} parent=0 // pred_fallthru
    _
  // Predicated region
  $region14: #{repact_softmax_reconstruct.1} parent=0 // pred_check
    _
  $region15: #{repact_softmax_reconstruct.1} parent=0 // pred_check_branch
    %45 = sbr.rel (0) target = $region17
  $region16: #{repact_softmax_reconstruct.1} parent=0 // pred_region
    _
  $region17: #{repact_softmax_reconstruct.1} parent=0 // pred_fallthru
    _

</llo_original>
